<compile_context>
chip_gen: v5e
topology: v5e:2x2
jax: 0.10.0
libtpu: 0.0.40
codegen_flags: <defaults>
</compile_context>

<pallas_src>
import jax
import jax.numpy as jnp
from jax.experimental import pallas as pl
from jax.experimental.pallas import tpu as pltpu


def _round_up(x, m):
    return (x + m - 1) // m * m


def _vq_kernel(x_ref, embed_t_ref, embed_ref, esq_ref, q_ref, idx_ref):
    """One row-tile of Euclidean vector quantization.

    x_ref:       (R, Dp)  f32  input rows (channels-last, zero padded on D)
    embed_t_ref: (Dp, Cp) f32  codebook transposed (pre-transposed in wrapper)
    embed_ref:   (Cp, Dp) f32  codebook (zero padded)
    esq_ref:     (1, Cp)  f32  per-code squared norm (padded codes -> +1e30)
    q_ref:       (R, Dp)  f32  quantized rows out
    idx_ref:     (R, 1)   i32  nearest-code index out
    """
    x = x_ref[...]

    # scores = -||x - e||^2 = 2 x.e - ||x||^2 - ||e||^2  (argmax == nearest code)
    xe = jnp.dot(x, embed_t_ref[...], preferred_element_type=jnp.float32)  # (R, Cp)
    x_sq = jnp.sum(x * x, axis=-1, keepdims=True)                          # (R, 1)
    neg_dist = 2.0 * xe - x_sq - esq_ref[...]                              # (R, Cp)

    # argmax over codes, first-match tie-break (matches torch.max(...).indices)
    max_v = jnp.max(neg_dist, axis=-1, keepdims=True)                      # (R, 1)
    code_ids = jax.lax.broadcasted_iota(jnp.int32, neg_dist.shape, 1)      # (R, Cp)
    c_pad = neg_dist.shape[-1]
    idx = jnp.min(jnp.where(neg_dist >= max_v, code_ids, c_pad),
                  axis=-1, keepdims=True)                                  # (R, 1)

    # dequantize via one-hot matmul (MXU-friendly gather from the codebook)
    onehot = (code_ids == idx).astype(jnp.float32)                         # (R, Cp)
    q = jnp.dot(onehot, embed_ref[...], preferred_element_type=jnp.float32)

    q_ref[...] = q.astype(q_ref.dtype)
    idx_ref[...] = idx.astype(jnp.int32)


def vector_quantization_forward(x_bdn, embed, *, rows_tile=128):
    """VectorQuantization.forward (inference, identity projections).

    x_bdn: (B, D, N) as in the PyTorch module.  embed: (C, D) codebook.
    Returns (quantize (B, D, N), embed_ind (B, N) int32, loss (1,) f32).
    """
    B, D, N = x_bdn.shape
    C, Dc = embed.shape
    assert Dc == D, "codebook dim must match feature dim (codebook_dim=None)"

    rows = B * N
    d_pad = _round_up(max(D, 128), 128)
    c_pad = _round_up(max(C, 128), 128)
    # row tile: multiple of 8 sublanes, no bigger than the (rounded) row count
    rows_tile = max(8, min(_round_up(rows_tile, 8), _round_up(rows, 8)))
    rows_pad = _round_up(rows, rows_tile)

    # (B, D, N) -> channels-last rows, zero-padded to lane/sublane-dense tiles.
    x_rows = jnp.transpose(x_bdn, (0, 2, 1)).reshape(rows, D)
    x_p = jnp.zeros((rows_pad, d_pad), jnp.float32).at[:rows, :D].set(
        x_rows.astype(jnp.float32))

    # Hoisted, batch-invariant codebook tensors (computed once, outside grid).
    e_p = jnp.zeros((c_pad, d_pad), jnp.float32).at[:C, :D].set(
        embed.astype(jnp.float32))
    e_t = e_p.T                                                    # (Dp, Cp)
    esq = jnp.sum(e_p * e_p, axis=-1)                              # (Cp,)
    esq = jnp.where(jnp.arange(c_pad) < C, esq, jnp.float32(1e30)).reshape(1, c_pad)

    grid = (rows_pad // rows_tile,)
    flops = 4 * rows_pad * d_pad * c_pad                           # scores + dequant
    bytes_accessed = 4 * (2 * rows_pad * d_pad + 2 * c_pad * d_pad
                          + c_pad + rows_pad)

    q_pad, idx_pad = pl.pallas_call(
        _vq_kernel,
        out_shape=(jax.ShapeDtypeStruct((rows_pad, d_pad), jnp.float32),
                   jax.ShapeDtypeStruct((rows_pad, 1), jnp.int32)),
        grid_spec=pltpu.PrefetchScalarGridSpec(
            num_scalar_prefetch=0,
            grid=grid,
            in_specs=[
                pl.BlockSpec((rows_tile, d_pad), lambda i: (i, 0)),   # x rows
                pl.BlockSpec((d_pad, c_pad), lambda i: (0, 0)),       # embed^T
                pl.BlockSpec((c_pad, d_pad), lambda i: (0, 0)),       # embed
                pl.BlockSpec((1, c_pad), lambda i: (0, 0)),           # ||e||^2
            ],
            out_specs=[
                pl.BlockSpec((rows_tile, d_pad), lambda i: (i, 0)),   # quantize
                pl.BlockSpec((rows_tile, 1), lambda i: (i, 0)),       # indices
            ],
        ),
        compiler_params=pltpu.CompilerParams(
            dimension_semantics=("parallel",),
            vmem_limit_bytes=32 * 1024 * 1024),
        cost_estimate=pl.CostEstimate(flops=flops, transcendentals=0,
                                      bytes_accessed=bytes_accessed),
    )(x_p, e_t, e_p, esq)

    quant = q_pad[:rows, :D].reshape(B, N, D)
    idx = idx_pad[:rows, 0].reshape(B, N)
    quant_bdn = jnp.transpose(quant, (0, 2, 1)).astype(x_bdn.dtype)
    loss = jnp.zeros((1,), jnp.float32)   # eval-mode loss is the constant 0
    return quant_bdn, idx, loss


def reference_forward(x_bdn, embed):
    """Pure-JAX reference matching the PyTorch module (eval mode)."""
    B, D, N = x_bdn.shape
    x = jnp.transpose(x_bdn, (0, 2, 1))                  # (B, N, D)
    flat = x.reshape(-1, D)
    embed_t = embed.T                                    # (D, C)
    dist = -(jnp.sum(flat ** 2, axis=1, keepdims=True)
             - 2.0 * flat @ embed_t
             + jnp.sum(embed_t ** 2, axis=0, keepdims=True))
    ind = jnp.argmax(dist, axis=-1)                      # (B*N,)
    quant = jnp.take(embed, ind, axis=0).reshape(B, N, D)
    return (jnp.transpose(quant, (0, 2, 1)),
            ind.reshape(B, N).astype(jnp.int32),
            jnp.zeros((1,), jnp.float32))


if __name__ == "__main__":
    DIM = 32            # dim (== codebook_dim, identity projections)
    CODEBOOK_SIZE = 64  # codebook_size
    BATCH = 2           # b
    SEQ = 8             # n

    key = jax.random.PRNGKey(0)
    k_embed, k_x = jax.random.split(key)

    # Already-initialized EuclideanCodebook.embed buffer (inited=True).
    embed = jax.random.normal(k_embed, (CODEBOOK_SIZE, DIM), jnp.float32)
    # Input x: (B, D, N) like the PyTorch forward.
    x = jax.random.normal(k_x, (BATCH, DIM, SEQ), jnp.float32)

    quant, ind, loss = vector_quantization_forward(x, embed)
    quant = jax.block_until_ready(quant)

    q_ref, ind_ref, loss_ref = reference_forward(x, embed)
    assert quant.shape == (BATCH, DIM, SEQ)
    assert ind.shape == (BATCH, SEQ)
    assert jnp.array_equal(ind, ind_ref), "index mismatch vs reference"
    assert jnp.allclose(quant, q_ref, atol=1e-5, rtol=1e-5), \
        f"max abs err {jnp.max(jnp.abs(quant - q_ref))}"
    assert jnp.allclose(loss, loss_ref)

    print("KERNEL_OK")
</pallas_src>

<mosaic_0001>
module attributes {stable_mosaic.version = 11 : i64} {
  func.func @_vq_kernel(%arg0: i32, %arg1: memref<16x128xf32, #tpu.memory_space<vmem>>, %arg2: memref<128x128xf32, #tpu.memory_space<vmem>>, %arg3: memref<128x128xf32, #tpu.memory_space<vmem>>, %arg4: memref<1x128xf32, #tpu.memory_space<vmem>>, %arg5: memref<16x128xf32, #tpu.memory_space<vmem>>, %arg6: memref<16x1xi32, #tpu.memory_space<vmem>>) attributes {dimension_semantics = [#tpu.dimension_semantics<parallel>], iteration_bounds = array<i64: 1>, scalar_prefetch = 0 : i64, scratch_operands = 0 : i64, tpu.core_type = #tpu.core_type<tc>, window_params = [{transform_indices = @transform_0, window_bounds = array<i64: 16, 128>}, {pipeline_mode = #tpu.pipeline_mode<synchronous>, transform_indices = @transform_1, window_bounds = array<i64: 128, 128>}, {pipeline_mode = #tpu.pipeline_mode<synchronous>, transform_indices = @transform_2, window_bounds = array<i64: 128, 128>}, {pipeline_mode = #tpu.pipeline_mode<synchronous>, transform_indices = @transform_3, window_bounds = array<i64: 1, 128>}, {transform_indices = @transform_4, window_bounds = array<i64: 16, 128>}, {transform_indices = @transform_5, window_bounds = array<i64: 16, 1>}]} {
    %c0 = arith.constant 0 : index
    %c0_0 = arith.constant 0 : index
    %0 = vector.load %arg1[%c0, %c0_0] : memref<16x128xf32, #tpu.memory_space<vmem>>, vector<16x128xf32>
    %c0_1 = arith.constant 0 : index
    %c0_2 = arith.constant 0 : index
    %1 = vector.load %arg2[%c0_1, %c0_2] : memref<128x128xf32, #tpu.memory_space<vmem>>, vector<128x128xf32>
    %cst = arith.constant dense<0.000000e+00> : vector<16x128xf32>
    %2 = tpu.matmul %0, %1, %cst {dimension_numbers = #tpu.dot_dimension_numbers<[1], [0], [0], [1], [0, 0, 1, 1], [], []>} : vector<16x128xf32>, vector<128x128xf32>, vector<16x128xf32> -> vector<16x128xf32>
    %3 = arith.mulf %0, %0 : vector<16x128xf32>
    %cst_3 = arith.constant dense<0.000000e+00> : vector<16xf32>
    %4 = vector.multi_reduction <add>, %3, %cst_3 [1] : vector<16x128xf32> to vector<16xf32>
    %5 = vector.shape_cast %4 : vector<16xf32> to vector<16x1xf32>
    %cst_4 = arith.constant 2.000000e+00 : f32
    %6 = vector.broadcast %cst_4 : f32 to vector<16x128xf32>
    %7 = arith.mulf %6, %2 : vector<16x128xf32>
    %8 = vector.broadcast %5 : vector<16x1xf32> to vector<16x128xf32>
    %9 = arith.subf %7, %8 : vector<16x128xf32>
    %c0_5 = arith.constant 0 : index
    %c0_6 = arith.constant 0 : index
    %10 = vector.load %arg4[%c0_5, %c0_6] : memref<1x128xf32, #tpu.memory_space<vmem>>, vector<1x128xf32>
    %11 = vector.broadcast %10 : vector<1x128xf32> to vector<16x128xf32>
    %12 = arith.subf %9, %11 : vector<16x128xf32>
    %cst_7 = arith.constant dense<0xFF800000> : vector<16xf32>
    %13 = vector.multi_reduction <maximumf>, %12, %cst_7 [1] : vector<16x128xf32> to vector<16xf32>
    %14 = vector.shape_cast %13 : vector<16xf32> to vector<16x1xf32>
    %15 = tpu.iota {dimensions = array<i32: 1>} : vector<16x128xi32>
    %16 = vector.broadcast %14 : vector<16x1xf32> to vector<16x128xf32>
    %17 = arith.cmpf oge, %12, %16 : vector<16x128xf32>
    %c128_i32 = arith.constant 128 : i32
    %18 = vector.broadcast %c128_i32 : i32 to vector<16x128xi32>
    %19 = arith.select %17, %15, %18 : vector<16x128xi1>, vector<16x128xi32>
    %cst_8 = arith.constant dense<2147483647> : vector<16xi32>
    %20 = vector.multi_reduction <minsi>, %19, %cst_8 [1] : vector<16x128xi32> to vector<16xi32>
    %21 = vector.shape_cast %20 : vector<16xi32> to vector<16x1xi32>
    %22 = vector.broadcast %21 : vector<16x1xi32> to vector<16x128xi32>
    %23 = arith.cmpi eq, %15, %22 : vector<16x128xi32>
    %24 = arith.extui %23 : vector<16x128xi1> to vector<16x128xi32>
    %25 = arith.sitofp %24 : vector<16x128xi32> to vector<16x128xf32>
    %c0_9 = arith.constant 0 : index
    %c0_10 = arith.constant 0 : index
    %26 = vector.load %arg3[%c0_9, %c0_10] : memref<128x128xf32, #tpu.memory_space<vmem>>, vector<128x128xf32>
    %cst_11 = arith.constant dense<0.000000e+00> : vector<16x128xf32>
    %27 = tpu.matmul %25, %26, %cst_11 {dimension_numbers = #tpu.dot_dimension_numbers<[1], [0], [0], [1], [0, 0, 1, 1], [], []>} : vector<16x128xf32>, vector<128x128xf32>, vector<16x128xf32> -> vector<16x128xf32>
    %c0_12 = arith.constant 0 : index
    %c0_13 = arith.constant 0 : index
    %28 = vector.load %arg5[%c0_12, %c0_13] : memref<16x128xf32, #tpu.memory_space<vmem>>, vector<16x128xf32>
    tpu.vector_store %arg5[%c0_12, %c0_13], %27 {strides = array<i32>} : memref<16x128xf32, #tpu.memory_space<vmem>>, vector<16x128xf32>,
    %c0_14 = arith.constant 0 : index
    %c0_15 = arith.constant 0 : index
    %29 = vector.load %arg6[%c0_14, %c0_15] : memref<16x1xi32, #tpu.memory_space<vmem>>, vector<16x1xi32>
    tpu.vector_store %arg6[%c0_14, %c0_15], %21 {strides = array<i32>} : memref<16x1xi32, #tpu.memory_space<vmem>>, vector<16x1xi32>,
    return
  }
  func.func @transform_0(%arg0: i32) -> (i32, i32) {
    %c0_i32 = arith.constant 0 : i32
    %c0_i32_0 = arith.constant 0 : i32
    return %arg0, %c0_i32 : i32, i32
  }
  func.func @transform_1(%arg0: i32) -> (i32, i32) {
    %c0_i32 = arith.constant 0 : i32
    %c0_i32_0 = arith.constant 0 : i32
    %c0_i32_1 = arith.constant 0 : i32
    return %c0_i32, %c0_i32_0 : i32, i32
  }
  func.func @transform_2(%arg0: i32) -> (i32, i32) {
    %c0_i32 = arith.constant 0 : i32
    %c0_i32_0 = arith.constant 0 : i32
    %c0_i32_1 = arith.constant 0 : i32
    return %c0_i32, %c0_i32_0 : i32, i32
  }
  func.func @transform_3(%arg0: i32) -> (i32, i32) {
    %c0_i32 = arith.constant 0 : i32
    %c0_i32_0 = arith.constant 0 : i32
    %c0_i32_1 = arith.constant 0 : i32
    return %c0_i32, %c0_i32_0 : i32, i32
  }
  func.func @transform_4(%arg0: i32) -> (i32, i32) {
    %c0_i32 = arith.constant 0 : i32
    %c0_i32_0 = arith.constant 0 : i32
    return %arg0, %c0_i32 : i32, i32
  }
  func.func @transform_5(%arg0: i32) -> (i32, i32) {
    %c0_i32 = arith.constant 0 : i32
    %c0_i32_0 = arith.constant 0 : i32
    return %arg0, %c0_i32 : i32, i32
  }
}

</mosaic_0001>

<llo_original>
// kernel: tpu_custom_call.1
$region0: #{tpu_custom_call.1}
  #allocation0 [shape = 'u32[]', space=smem, size = 0x4, offset = 0x4, fixed_abs, tag = 'smem constant byte address 0x4 - core index']
  #allocation1 [shape = 'u32[72,128]{1,0:T(1,128)}', space=vmem, size = 0x9000, scoped, tag = 'internal scratch']
  %s0 = inlined_call_operand.hbm [shape: f32[16,128], index: 0, kind: input, shape index: {}]
  %s1 = inlined_call_operand.hbm [shape: f32[128,128], index: 1, kind: input, shape index: {}]
  %s2 = inlined_call_operand.hbm [shape: f32[128,128], index: 2, kind: input, shape index: {}]
  %s3 = inlined_call_operand.vmem [shape: f32[1,128], index: 3, kind: input, shape index: {}]
  %s4 = inlined_call_operand.hbm [shape: f32[16,128], index: 4, kind: output, shape index: {0}]
  %s5 = inlined_call_operand.vmem [shape: s32[16,1], index: 5, kind: output, shape index: {1}]
  %6 = xla_tuple %s4, %s5
  %s7 = sld [smem:[#allocation0]]
  $region46: #{tpu_custom_call.1} parent=0
    _
  %s9 = ssub.s32 1, %s7
  %s10 = scalar_select 0, %s9, %s7
  $region1: #{tpu_custom_call.1} parent=0
    #allocation2 [shape = 'u8[8192]{0}', space=vmem, size = 0x2000, scoped, tag = 'input window, operand 0, single buffered']
    #allocation3 [shape = 's32[1]{0}', space=sflag, size = 0x4, scoped, tag = 'scoped memory for tpu_custom_call.1']
    #allocation4 [shape = 's32[1]{0}', space=sflag, size = 0x4, scoped, tag = 'scoped memory for tpu_custom_call.1']
    #allocation5 [shape = 'u8[65536]{0}', space=vmem, size = 0x10000, scoped, tag = 'input window, operand 1, single buffered']
    #allocation6 [shape = 's32[1]{0}', space=sflag, size = 0x4, scoped, tag = 'scoped memory for tpu_custom_call.1']
    #allocation7 [shape = 'u8[65536]{0}', space=vmem, size = 0x10000, scoped, tag = 'input window, operand 2, single buffered']
    #allocation8 [shape = 'u8[8192]{0}', space=vmem, size = 0x2000, scoped, tag = 'output window, operand 0, single buffered']
    %11 = vsyncpa [#allocation3], 0
    %12 = vsyncpa [#allocation6], 0
    %13 = vsyncpa [#allocation4], 0
    // Predicated region
    $region2: #{tpu_custom_call.1} parent=1 // pred_check
      _
    $region3: #{tpu_custom_call.1} parent=1 // pred_check_branch
      %15 = sbr.rel (0) target = $region5
    $region4: #{tpu_custom_call.1} parent=1 // pred_region
      %17 = vsyncadd [#allocation3], 0
      %s18 = sshll.u32 %s0, 4
      %s19 = int_to_ptr.hbm [resolvable:$true] %s18
      %s20 = sshll.u32 [#allocation2], 4
      %s21 = int_to_ptr.vmem [resolvable:$true] %s20
      %26 = dma.hbm_to_vmem [thread:$0]  %s19, 256, %s21, [#allocation3], 128, 128, 8
    $region5: #{tpu_custom_call.1} parent=1 // pred_fallthru
      _
    // Predicated region
    $region6: #{tpu_custom_call.1} parent=1 // pred_check
      _
    $region7: #{tpu_custom_call.1} parent=1 // pred_check_branch
      %28 = sbr.rel (0) target = $region9
    $region8: #{tpu_custom_call.1} parent=1 // pred_region
      %30 = vsyncadd [#allocation6], 0
      %s31 = sshll.u32 %s1, 4
      %s32 = int_to_ptr.hbm [resolvable:$true] %s31
      %s33 = sshll.u32 [#allocation5], 4
      %s34 = int_to_ptr.vmem [resolvable:$true] %s33
      %39 = dma.hbm_to_vmem [thread:$0]  %s32, 2048, %s34, [#allocation6], 128, 128, 8
    $region9: #{tpu_custom_call.1} parent=1 // pred_fallthru
      _
    // Predicated region
    $region10: #{tpu_custom_call.1} parent=1 // pred_check
      _
    $region11: #{tpu_custom_call.1} parent=1 // pred_check_branch
      %41 = sbr.rel (0) target = $region13
    $region12: #{tpu_custom_call.1} parent=1 // pred_region
      %43 = vsyncadd [#allocation6], 0
      %s44 = sshll.u32 %s2, 4
      %s45 = int_to_ptr.hbm [resolvable:$true] %s44
      %s46 = sshll.u32 [#allocation7], 4
      %s47 = int_to_ptr.vmem [resolvable:$true] %s46
      %52 = dma.hbm_to_vmem [thread:$0]  %s45, 2048, %s47, [#allocation6], 128, 128, 8
    $region13: #{tpu_custom_call.1} parent=1 // pred_fallthru
      _
    // Predicated region
    $region14: #{tpu_custom_call.1} parent=1 // pred_check
      _
    $region15: #{tpu_custom_call.1} parent=1 // pred_check_branch
      %54 = sbr.rel (0) target = $region17
    $region16: #{tpu_custom_call.1} parent=1 // pred_region
      _
    $region17: #{tpu_custom_call.1} parent=1 // pred_fallthru
      _
    // Predicated region
    $region18: #{tpu_custom_call.1} parent=1 // pred_check
      _
    $region19: #{tpu_custom_call.1} parent=1 // pred_check_branch
      %56 = sbr.rel (0) target = $region21
    $region20: #{tpu_custom_call.1} parent=1 // pred_region
      %58 = dma.done [#allocation3], 256
    $region21: #{tpu_custom_call.1} parent=1 // pred_fallthru
      _
    // Predicated region
    $region22: #{tpu_custom_call.1} parent=1 // pred_check
      _
    $region23: #{tpu_custom_call.1} parent=1 // pred_check_branch
      %60 = sbr.rel (0) target = $region25
    $region24: #{tpu_custom_call.1} parent=1 // pred_region
      %62 = dma.done [#allocation6], 2048
    $region25: #{tpu_custom_call.1} parent=1 // pred_fallthru
      _
    // Predicated region
    $region26: #{tpu_custom_call.1} parent=1 // pred_check
      _
    $region27: #{tpu_custom_call.1} parent=1 // pred_check_branch
      %64 = sbr.rel (0) target = $region29
    $region28: #{tpu_custom_call.1} parent=1 // pred_region
      %66 = dma.done [#allocation6], 2048
    $region29: #{tpu_custom_call.1} parent=1 // pred_fallthru
      _
    %v67 = vld [vmem:[#allocation2] sm:$0xff]
    %v68 = vld [vmem:[#allocation2 + $0x8] sm:$0xff]
    %v69 = vld [vmem:[#allocation5] sm:$0xff]
    %v70 = vld [vmem:[#allocation5 + $0x8] sm:$0xff]
    %v71 = vld [vmem:[#allocation5 + $0x10] sm:$0xff]
    %v72 = vld [vmem:[#allocation5 + $0x18] sm:$0xff]
    %v73 = vld [vmem:[#allocation5 + $0x20] sm:$0xff]
    %v74 = vld [vmem:[#allocation5 + $0x28] sm:$0xff]
    %v75 = vld [vmem:[#allocation5 + $0x30] sm:$0xff]
    %v76 = vld [vmem:[#allocation5 + $0x38] sm:$0xff]
    %v77 = vld [vmem:[#allocation5 + $0x40] sm:$0xff]
    %v78 = vld [vmem:[#allocation5 + $0x48] sm:$0xff]
    %v79 = vld [vmem:[#allocation5 + $0x50] sm:$0xff]
    %v80 = vld [vmem:[#allocation5 + $0x58] sm:$0xff]
    %v81 = vld [vmem:[#allocation5 + $0x60] sm:$0xff]
    %v82 = vld [vmem:[#allocation5 + $0x68] sm:$0xff]
    %v83 = vld [vmem:[#allocation5 + $0x70] sm:$0xff]
    %v84 = vld [vmem:[#allocation5 + $0x78] sm:$0xff]
    %85 = vmatpush.msra.mxu0 %v84
    %86 = vmatpush.msra.mxu0 %v83
    %87 = vmatpush.msra.mxu0 %v82
    %88 = vmatpush.msra.mxu0 %v81
    %89 = vmatpush.msra.mxu0 %v80
    %90 = vmatpush.msra.mxu0 %v79
    %91 = vmatpush.msra.mxu0 %v78
    %92 = vmatpush.msra.mxu0 %v77
    %93 = vmatpush.msra.mxu0 %v76
    %94 = vmatpush.msra.mxu0 %v75
    %95 = vmatpush.msra.mxu0 %v74
    %96 = vmatpush.msra.mxu0 %v73
    %97 = vmatpush.msra.mxu0 %v72
    %98 = vmatpush.msra.mxu0 %v71
    %99 = vmatpush.msra.mxu0 %v70
    %100 = vmatpush.msra.mxu0 %v69
    %101 = vmatmul.f32.gmra.mxu0 %v67
    %v102 = vpop.f32.mrf.mxu0
    %v103 = vadd.f32 0.0, %v102
    %104 = vmatmul.f32.gmra.mxu0 %v68
    %v105 = vpop.f32.mrf.mxu0
    %v106 = vadd.f32 0.0, %v105
    %107 = vdwg.mxu0
    %v108 = vmul.f32 %v67, %v67
    %v109 = vmul.f32 %v68, %v68
    %110 = vadd.xlane.f32.xlu0 %v108
    %v111 = vpop.xlane.xlu0 %110
    %112 = vadd.xlane.f32.xlu0 %v109
    %v113 = vpop.xlane.xlu0 %112
    %v114 = vmul.f32 %v103, 2.0
    %v115 = vmul.f32 %v106, 2.0
    %v116 = vsub.f32 %v114, %v111
    %v117 = vsub.f32 %v115, %v113
    %v118 = vld [vmem:[%s3] sm:$0x1]
    %v120 = vperm.slane %v118, 0
    %v122 = vsub.f32 %v116, %v120
    %v123 = vsub.f32 %v117, %v120
    %124 = vmax.xlane.f32.xlu0 %v122
    %v125 = vpop.xlane.xlu0 %124
    %126 = vmax.xlane.f32.xlu0 %v123
    %v127 = vpop.xlane.xlu0 %126
    %v128 = vlaneseq
    %v129 = vand.u32 %v128, 127
    %vm130 = vcmp.ge.f32.partialorder %v122, %v125
    %vm131 = vcmp.ge.f32.partialorder %v123, %v127
    %v132 = vsel %vm130, %v129, 128
    %v133 = vsel %vm131, %v129, 128
    %v134 = vand.u32 %v132, 65535
    %v135 = vshra.s32 %v132, 16
    %v136 = vcvt.s32.f32 %v134
    %v137 = vcvt.s32.f32 %v135
    %138 = vmin.xlane.f32.xlu0 %v137
    %v139 = vpop.xlane.xlu0 %138
    %vm140 = vcmp.eq.f32.partialorder %v137, %v139
    %v141 = vsel %vm140, %v136, inf
    %142 = vmin.xlane.f32.xlu0 %v141
    %v143 = vpop.xlane.xlu0 %142
    %v144 = vcvt.f32.s32 %v143
    %v145 = vcvt.f32.s32 %v139
    %v146 = vshll.u32 %v145, 16
    %v147 = vadd.s32 %v146, %v144
    %v148 = vand.u32 %v133, 65535
    %v149 = vshra.s32 %v133, 16
    %v150 = vcvt.s32.f32 %v148
    %v151 = vcvt.s32.f32 %v149
    %152 = vmin.xlane.f32.xlu0 %v151
    %v153 = vpop.xlane.xlu0 %152
    %vm154 = vcmp.eq.f32.partialorder %v151, %v153
    %v155 = vsel %vm154, %v150, inf
    %156 = vmin.xlane.f32.xlu0 %v155
    %v157 = vpop.xlane.xlu0 %156
    %v158 = vcvt.f32.s32 %v157
    %v159 = vcvt.f32.s32 %v153
    %v160 = vshll.u32 %v159, 16
    %v161 = vadd.s32 %v160, %v158
    %vm162 = vcmp.eq.s32.totalorder %v129, %v147
    %vm163 = vcmp.eq.s32.totalorder %v129, %v161
    %v164 = vsel %vm162, 1, 0
    %v165 = vsel %vm163, 1, 0
    %v166 = vcvt.s32.f32 %v164
    %v167 = vcvt.s32.f32 %v165
    %v168 = vld [vmem:[#allocation7] sm:$0xff]
    %v169 = vld [vmem:[#allocation7 + $0x8] sm:$0xff]
    %v170 = vld [vmem:[#allocation7 + $0x10] sm:$0xff]
    %v171 = vld [vmem:[#allocation7 + $0x18] sm:$0xff]
    %v172 = vld [vmem:[#allocation7 + $0x20] sm:$0xff]
    %v173 = vld [vmem:[#allocation7 + $0x28] sm:$0xff]
    %v174 = vld [vmem:[#allocation7 + $0x30] sm:$0xff]
    %v175 = vld [vmem:[#allocation7 + $0x38] sm:$0xff]
    %v176 = vld [vmem:[#allocation7 + $0x40] sm:$0xff]
    %v177 = vld [vmem:[#allocation7 + $0x48] sm:$0xff]
    %v178 = vld [vmem:[#allocation7 + $0x50] sm:$0xff]
    %v179 = vld [vmem:[#allocation7 + $0x58] sm:$0xff]
    %v180 = vld [vmem:[#allocation7 + $0x60] sm:$0xff]
    %v181 = vld [vmem:[#allocation7 + $0x68] sm:$0xff]
    %v182 = vld [vmem:[#allocation7 + $0x70] sm:$0xff]
    %v183 = vld [vmem:[#allocation7 + $0x78] sm:$0xff]
    %184 = vmatpush.msra.mxu0 %v183
    %185 = vmatpush.msra.mxu0 %v182
    %186 = vmatpush.msra.mxu0 %v181
    %187 = vmatpush.msra.mxu0 %v180
    %188 = vmatpush.msra.mxu0 %v179
    %189 = vmatpush.msra.mxu0 %v178
    %190 = vmatpush.msra.mxu0 %v177
    %191 = vmatpush.msra.mxu0 %v176
    %192 = vmatpush.msra.mxu0 %v175
    %193 = vmatpush.msra.mxu0 %v174
    %194 = vmatpush.msra.mxu0 %v173
    %195 = vmatpush.msra.mxu0 %v172
    %196 = vmatpush.msra.mxu0 %v171
    %197 = vmatpush.msra.mxu0 %v170
    %198 = vmatpush.msra.mxu0 %v169
    %199 = vmatpush.msra.mxu0 %v168
    %200 = vmatmul.f32.gmra.mxu0 %v166
    %v201 = vpop.f32.mrf.mxu0
    %v202 = vadd.f32 0.0, %v201
    %203 = vmatmul.f32.gmra.mxu0 %v167
    %v204 = vpop.f32.mrf.mxu0
    %v205 = vadd.f32 0.0, %v204
    %206 = vdwg.mxu0
    %207 = vst [vmem:[#allocation8] sm:$0xff] %v202
    %208 = vst [vmem:[#allocation8 + $0x8] sm:$0xff] %v205
    %vm209 = vcmask 7168
    %210 = vst.msk [vmem:[%s5] sm:$0xff] %vm209, %v147
    %211 = vst.msk [vmem:[%s5 + $0x8] sm:$0xff] %vm209, %v161
    // Predicated region
    $region30: #{tpu_custom_call.1} parent=1 // pred_check
      _
    $region31: #{tpu_custom_call.1} parent=1 // pred_check_branch
      %213 = sbr.rel (0) target = $region33
    $region32: #{tpu_custom_call.1} parent=1 // pred_region
      %215 = vsyncadd [#allocation4], 0
      %s216 = sshll.u32 [#allocation8], 4
      %s217 = int_to_ptr.vmem [resolvable:$true] %s216
      %s218 = sshll.u32 %s4, 4
      %s219 = int_to_ptr.hbm [resolvable:$true] %s218
      %224 = dma.vmem_to_hbm [thread:$0]  %s217, 256, %s219, [#allocation4], 128, 128, 8
    $region33: #{tpu_custom_call.1} parent=1 // pred_fallthru
      _
    // Predicated region
    $region34: #{tpu_custom_call.1} parent=1 // pred_check
      _
    $region35: #{tpu_custom_call.1} parent=1 // pred_check_branch
      %226 = sbr.rel (0) target = $region37
    $region36: #{tpu_custom_call.1} parent=1 // pred_region
      _
    $region37: #{tpu_custom_call.1} parent=1 // pred_fallthru
      _
    // Predicated region
    $region38: #{tpu_custom_call.1} parent=1 // pred_check
      _
    $region39: #{tpu_custom_call.1} parent=1 // pred_check_branch
      %228 = sbr.rel (0) target = $region41
    $region40: #{tpu_custom_call.1} parent=1 // pred_region
      %230 = dma.done [#allocation4], 256
    $region41: #{tpu_custom_call.1} parent=1 // pred_fallthru
      _
    // Predicated region
    $region42: #{tpu_custom_call.1} parent=1 // pred_check
      _
    $region43: #{tpu_custom_call.1} parent=1 // pred_check_branch
      %232 = sbr.rel (0) target = $region45
    $region44: #{tpu_custom_call.1} parent=1 // pred_region
      _
    $region45: #{tpu_custom_call.1} parent=1 // pred_fallthru
      _
    %233 = vsyncpa [#allocation3], 1
    %234 = vsyncpa [#allocation6], 1
    %235 = vsyncpa [#allocation4], 1

</llo_original>
